<compile_context>
chip_gen: v7x
topology: tpu7x:2x2x1
jax: 0.10.0
libtpu: 0.0.40
codegen_flags: <defaults>
</compile_context>

<pallas_src>
import functools

import jax
import jax.numpy as jnp
from jax import lax
from jax.experimental import pallas as pl
from jax.experimental.pallas import tpu as pltpu


def _round_up(x, m):
    return ((x + m - 1) // m) * m


def _sublane_multiple(dtype):
    # f32 -> 8, bf16 -> 16, int8/fp8 -> 32  (min second-to-last tile dim)
    itemsize = jnp.dtype(dtype).itemsize
    return max(8, 32 // itemsize)


def _arloss_kernel(x_ref, t_ref, part_ref, *, total_rows, need_mask):
    x = x_ref[...].astype(jnp.float32)
    t = t_ref[...].astype(jnp.float32)
    eps = jnp.float32(1e-6)

    classes = jnp.round(t)                      # torch.round: half-to-even
    delta = x - classes
    abs_delta = jnp.abs(delta)

    # Non-negative by construction: ceil(x)-x == |x-ceil(x)|, x-floor(x) == |x-floor(x)|
    ceil_dist = jnp.ceil(x) - x
    floor_dist = x - jnp.floor(x)
    # delta >= 0 branch gets the +eps inside the hinge.
    thresh = jnp.where(delta >= jnp.float32(0.0), ceil_dist - eps, floor_dist)
    loss = jnp.maximum(jnp.float32(0.0), abs_delta - thresh)

    block_rows, lanes = loss.shape
    if need_mask:
        # Ragged last block: zero out rows past the real row count.
        row0 = pl.program_id(0) * block_rows
        row_ids = row0 + lax.broadcasted_iota(jnp.int32, loss.shape, 0)
        loss = jnp.where(row_ids < total_rows, loss, jnp.float32(0.0))

    # Sublane-group reduce down to 8 rows (pure vector adds, unmasked stores);
    # the remaining tiny reduce happens once in the JAX wrapper.
    if block_rows % 8 == 0:
        part = loss.reshape(block_rows // 8, 8, lanes).sum(axis=0)
    else:
        part = jnp.sum(loss, axis=0, keepdims=True)
    part_ref[0] = part


def _ar_loss_jnp(inp, target, reduction="mean"):
    """Fused pure-jnp ARLoss (reference and small-input fast path)."""
    x = inp.astype(jnp.float32)
    t = target.astype(jnp.float32)
    eps = jnp.float32(1e-6)
    classes = jnp.round(t)
    delta = x - classes
    thresh = jnp.where(delta >= 0.0, (jnp.ceil(x) - x) - eps, x - jnp.floor(x))
    loss = jnp.maximum(0.0, jnp.abs(delta) - thresh)
    if reduction == "sum":
        return jnp.sum(loss)
    if reduction == "mean":
        return jnp.mean(loss)
    return loss


def ar_loss(inp, target, reduction="mean", *, max_block_rows=1024,
            small_input_threshold=65536):
    """ARLoss forward. `inp`/`target` are (batch, dim); returns a f32 scalar."""
    assert inp.shape == target.shape and inp.ndim == 2
    batch, dim = inp.shape
    n = batch * dim

    if reduction not in ("sum", "mean"):
        # TODO(synk): reduction='none' (per-element loss matrix) is served by
        # the fused jnp path rather than a dedicated elementwise Pallas kernel.
        return _ar_loss_jnp(inp, target, reduction)

    # Small-input fast path: pallas_call launch overhead dominates there and
    # XLA already fuses the elementwise + reduce into a single pass.
    if n < small_input_threshold:
        return _ar_loss_jnp(inp, target, reduction)

    sub = max(_sublane_multiple(inp.dtype), _sublane_multiple(target.dtype))

    if n % 128 == 0:
        # Free lane-dense reshape (no copy): widest lane count dividing n.
        lanes = next(l for l in (1024, 512, 256, 128) if n % l == 0)
        rows = n // lanes
        x2 = inp.reshape(rows, lanes)
        t2 = target.reshape(rows, lanes)
    else:
        # Ragged total: stream the original (batch, dim) slab directly and mask
        # tail rows in-kernel.  No pad/concatenate copy of the inputs.
        lanes = dim
        rows = batch
        x2, t2 = inp, target

    if rows < sub:
        block_rows = rows                       # full-extent block (tiny rows)
    else:
        byte_budget = 4 * 1024 * 1024           # per-input tile (f32 bytes)
        rows_by_bytes = max(sub, (byte_budget // (lanes * 4)) // sub * sub)
        # Ensure >= 2 blocks when possible so the "parallel" grid axis splits
        # across both TensorCores on v7x.
        half = _round_up(pl.cdiv(rows, 2), sub)
        block_rows = max(sub, min(max_block_rows, rows_by_bytes, half))
    num_blocks = pl.cdiv(rows, block_rows)
    need_mask = (rows % block_rows) != 0
    part_rows = 8 if (block_rows % 8 == 0) else 1

    partials = pl.pallas_call(
        functools.partial(_arloss_kernel, total_rows=rows, need_mask=need_mask),
        out_shape=jax.ShapeDtypeStruct((num_blocks, part_rows, lanes),
                                       jnp.float32),
        grid_spec=pltpu.PrefetchScalarGridSpec(
            num_scalar_prefetch=0,
            grid=(num_blocks,),
            in_specs=[
                pl.BlockSpec((block_rows, lanes), lambda i: (i, 0)),
                pl.BlockSpec((block_rows, lanes), lambda i: (i, 0)),
            ],
            out_specs=pl.BlockSpec((1, part_rows, lanes), lambda i: (i, 0, 0)),
        ),
        compiler_params=pltpu.CompilerParams(
            dimension_semantics=("parallel",),
            vmem_limit_bytes=32 * 1024 * 1024,
        ),
    )(x2, t2)

    loss_sum = jnp.sum(partials)
    if reduction == "sum":
        return loss_sum
    return loss_sum / jnp.float32(n)


if __name__ == "__main__":
    key = jax.random.PRNGKey(0)
    k1, k2, k3, k4, k5, k6 = jax.random.split(key, 6)

    # 1) Small (batch, dim) regression-style inputs; force the kernel path
    #    (lane-dense reshape, single tiny block), 'mean' reduction.
    batch, dim = 8, 32
    inp = jax.random.normal(k1, (batch, dim), dtype=jnp.float32) * 1.5
    target = jax.random.normal(k2, (batch, dim), dtype=jnp.float32) * 1.5
    out_mean = jax.block_until_ready(
        ar_loss(inp, target, reduction="mean", small_input_threshold=0))
    ref_mean = _ar_loss_jnp(inp, target, reduction="mean")
    assert jnp.allclose(out_mean, ref_mean, rtol=1e-5, atol=1e-6), (out_mean, ref_mean)

    # Default call exercises the small-input fast path.
    out_fast = jax.block_until_ready(ar_loss(inp, target, reduction="mean"))
    assert jnp.allclose(out_fast, ref_mean, rtol=1e-5, atol=1e-6), (out_fast, ref_mean)

    # 2) Ragged shape (n not a multiple of 128): direct 2-D slab, 2 blocks,
    #    in-kernel tail-row masking, 'sum' reduction.
    batch2, dim2 = 37, 100
    inp2 = jax.random.normal(k3, (batch2, dim2), dtype=jnp.float32) * 1.5
    target2 = jax.random.normal(k4, (batch2, dim2), dtype=jnp.float32) * 1.5
    out_sum = jax.block_until_ready(
        ar_loss(inp2, target2, reduction="sum", small_input_threshold=0))
    ref_sum = _ar_loss_jnp(inp2, target2, reduction="sum")
    assert jnp.allclose(out_sum, ref_sum, rtol=1e-5, atol=1e-5), (out_sum, ref_sum)

    # 3) bf16 streaming, lane-dense multi-block path (16-row bf16 tiles).
    batch3, dim3 = 64, 512
    inp3 = (jax.random.normal(k5, (batch3, dim3), dtype=jnp.float32) * 1.5
            ).astype(jnp.bfloat16)
    target3 = (jax.random.normal(k6, (batch3, dim3), dtype=jnp.float32) * 1.5
               ).astype(jnp.bfloat16)
    out_bf = jax.block_until_ready(
        ar_loss(inp3, target3, reduction="mean", small_input_threshold=0))
    ref_bf = _ar_loss_jnp(inp3, target3, reduction="mean")
    assert jnp.allclose(out_bf, ref_bf, rtol=1e-5, atol=1e-5), (out_bf, ref_bf)

    print("KERNEL_OK")
</pallas_src>

<mosaic_0001>
module attributes {stable_mosaic.version = 11 : i64} {
  func.func @_arloss_kernel(%arg0: i32, %arg1: memref<1x256xf32, #tpu.memory_space<vmem>>, %arg2: memref<1x256xf32, #tpu.memory_space<vmem>>, %arg3: memref<1x1x256xf32, #tpu.memory_space<vmem>>) attributes {dimension_semantics = [#tpu.dimension_semantics<parallel>], iteration_bounds = array<i64: 1>, scalar_prefetch = 0 : i64, scratch_operands = 0 : i64, tpu.core_type = #tpu.core_type<tc>, window_params = [{transform_indices = @transform_0, window_bounds = array<i64: 1, 256>}, {transform_indices = @transform_1, window_bounds = array<i64: 1, 256>}, {transform_indices = @transform_2, window_bounds = array<i64: 1, 1, 256>}]} {
    %c0 = arith.constant 0 : index
    %c0_0 = arith.constant 0 : index
    %0 = vector.load %arg1[%c0, %c0_0] : memref<1x256xf32, #tpu.memory_space<vmem>>, vector<1x256xf32>
    %c0_1 = arith.constant 0 : index
    %c0_2 = arith.constant 0 : index
    %1 = vector.load %arg2[%c0_1, %c0_2] : memref<1x256xf32, #tpu.memory_space<vmem>>, vector<1x256xf32>
    %2 = math.roundeven %1 : vector<1x256xf32>
    %3 = arith.subf %0, %2 : vector<1x256xf32>
    %4 = math.absf %3 : vector<1x256xf32>
    %5 = math.ceil %0 : vector<1x256xf32>
    %6 = arith.subf %5, %0 : vector<1x256xf32>
    %7 = math.floor %0 : vector<1x256xf32>
    %8 = arith.subf %0, %7 : vector<1x256xf32>
    %cst = arith.constant 0.000000e+00 : f32
    %9 = vector.broadcast %cst : f32 to vector<1x256xf32>
    %10 = arith.cmpf oge, %3, %9 : vector<1x256xf32>
    %cst_3 = arith.constant 9.99999997E-7 : f32
    %11 = vector.broadcast %cst_3 : f32 to vector<1x256xf32>
    %12 = arith.subf %6, %11 : vector<1x256xf32>
    %13 = arith.select %10, %12, %8 : vector<1x256xi1>, vector<1x256xf32>
    %14 = arith.subf %4, %13 : vector<1x256xf32>
    %cst_4 = arith.constant 0.000000e+00 : f32
    %15 = vector.broadcast %cst_4 : f32 to vector<1x256xf32>
    %16 = arith.maximumf %15, %14 : vector<1x256xf32>
    %cst_5 = arith.constant dense<0.000000e+00> : vector<256xf32>
    %17 = vector.multi_reduction <add>, %16, %cst_5 [0] : vector<1x256xf32> to vector<256xf32>
    %18 = vector.shape_cast %17 : vector<256xf32> to vector<1x256xf32>
    %c0_6 = arith.constant 0 : index
    %c0_7 = arith.constant 0 : index
    %c0_8 = arith.constant 0 : index
    %19 = vector.load %arg3[%c0_6, %c0_7, %c0_8] : memref<1x1x256xf32, #tpu.memory_space<vmem>>, vector<1x1x256xf32>
    %20 = vector.shape_cast %19 : vector<1x1x256xf32> to vector<1x256xf32>
    %21 = vector.shape_cast %18 : vector<1x256xf32> to vector<1x1x256xf32>
    tpu.vector_store %arg3[%c0_6, %c0_7, %c0_8], %21 {strides = array<i32>} : memref<1x1x256xf32, #tpu.memory_space<vmem>>, vector<1x1x256xf32>,
    return
  }
  func.func @transform_0(%arg0: i32) -> (i32, i32) {
    %c0_i32 = arith.constant 0 : i32
    %c0_i32_0 = arith.constant 0 : i32
    return %arg0, %c0_i32 : i32, i32
  }
  func.func @transform_1(%arg0: i32) -> (i32, i32) {
    %c0_i32 = arith.constant 0 : i32
    %c0_i32_0 = arith.constant 0 : i32
    return %arg0, %c0_i32 : i32, i32
  }
  func.func @transform_2(%arg0: i32) -> (i32, i32, i32) {
    %c0_i32 = arith.constant 0 : i32
    %c0_i32_0 = arith.constant 0 : i32
    %c0_i32_1 = arith.constant 0 : i32
    return %arg0, %c0_i32, %c0_i32_0 : i32, i32, i32
  }
}

</mosaic_0001>

<llo_original>
// kernel: tpu_custom_call.1
$region0: #{tpu_custom_call.1}
  #allocation0 [shape = 'u32[]', space=smem, size = 0x4, offset = 0x4, fixed_abs, tag = 'smem constant byte address 0x4 - core index']
  #allocation1 [shape = 'u32[144,128]{1,0:T(1,128)}', space=vmem, size = 0x12000, scoped, tag = 'internal scratch']
  %s0 = inlined_call_operand.hbm [shape: f32[1,256], index: 0, kind: input, shape index: {}]
  %s1 = inlined_call_operand.vmem [shape: f32[1,256], index: 1, kind: input, shape index: {}]
  %s2 = inlined_call_operand.hbm [shape: f32[1,1,256], index: 2, kind: output, shape index: {}]
  %s3 = sld [smem:[#allocation0]]
  $region22: #{tpu_custom_call.1} parent=0
    _
  %s5 = ssub.s32 1, %s3
  %s6 = scalar_select 0, %s5, %s3
  $region1: #{tpu_custom_call.1} parent=0
    #allocation2 [shape = 'u8[1024]{0}', space=vmem, size = 0x400, scoped, tag = 'input window, operand 0, single buffered']
    #allocation3 [shape = 's32[1]{0}', space=sflag, size = 0x4, scoped, tag = 'scoped memory for tpu_custom_call.1']
    #allocation4 [shape = 's32[1]{0}', space=sflag, size = 0x4, scoped, tag = 'scoped memory for tpu_custom_call.1']
    #allocation5 [shape = 'u8[1024]{0}', space=vmem, size = 0x400, scoped, tag = 'output window, operand 0, single buffered']
    %7 = vsyncpa [#allocation3], 0
    %8 = vsyncpa [#allocation4], 0
    // Predicated region
    $region2: #{tpu_custom_call.1} parent=1 // pred_check
      _
    $region3: #{tpu_custom_call.1} parent=1 // pred_check_branch
      %10 = sbr.rel (0) target = $region5
    $region4: #{tpu_custom_call.1} parent=1 // pred_region
      %s12 = ssub.s32 32, 32
      %13 = vsyncadd [#allocation3], %s12
      %s15 = sshll.u32 [#allocation2], 4
      %s16 = int_to_ptr.vmem [resolvable:$true] %s15
      %18 = dma.hbm_to_vmem [thread:$0]  %s0, 32, %s16, [#allocation3]
    $region5: #{tpu_custom_call.1} parent=1 // pred_fallthru
      _
    // Predicated region
    $region6: #{tpu_custom_call.1} parent=1 // pred_check
      _
    $region7: #{tpu_custom_call.1} parent=1 // pred_check_branch
      %20 = sbr.rel (0) target = $region9
    $region8: #{tpu_custom_call.1} parent=1 // pred_region
      _
    $region9: #{tpu_custom_call.1} parent=1 // pred_fallthru
      _
    // Predicated region
    $region10: #{tpu_custom_call.1} parent=1 // pred_check
      _
    $region11: #{tpu_custom_call.1} parent=1 // pred_check_branch
      %22 = sbr.rel (0) target = $region13
    $region12: #{tpu_custom_call.1} parent=1 // pred_region
      %23 = dma.done [#allocation3], 32
    $region13: #{tpu_custom_call.1} parent=1 // pred_fallthru
      _
    %v24 = vld [vmem:[#allocation2] sm:$0x3]
    %v25 = vld [vmem:[%s1] sm:$0x3]
    %v26 = vround.ne.pseudo %v25
    %v27 = vsub.f32 %v24, %v26
    %v28 = vand.u32 2147483647, %v27
    %v29 = vceil.f32 %v24
    %v30 = vsub.f32 %v29, %v24
    %v31 = vfloor.f32 %v24
    %v32 = vsub.f32 %v24, %v31
    %vm33 = vcmp.ge.f32.partialorder %v27, 0.0
    %v34 = vsub.f32 %v30, 1e-06
    %v35 = vsel %vm33, %v34, %v32
    %v36 = vsub.f32 %v28, %v35
    %v37 = vmax.f32 %v36, 0.0
    %v38 = vadd.f32 %v37, 0.0
    %v39 = vlaneseq
    %vm40 = vcmp.ge.s32.totalorder %v39, 0
    %vm41 = vcmp.lt.s32.totalorder %v39, 256
    %vm42 = vmand %vm40, %vm41
    %43 = vst.msk [vmem:[#allocation5] sm:$0x3] %vm42, %v38
    // Predicated region
    $region14: #{tpu_custom_call.1} parent=1 // pred_check
      _
    $region15: #{tpu_custom_call.1} parent=1 // pred_check_branch
      %45 = sbr.rel (0) target = $region17
    $region16: #{tpu_custom_call.1} parent=1 // pred_region
      %s47 = ssub.s32 32, 32
      %48 = vsyncadd [#allocation4], %s47
      %s50 = sshll.u32 [#allocation5], 4
      %s51 = int_to_ptr.vmem [resolvable:$true] %s50
      %53 = dma.vmem_to_hbm [thread:$0]  %s51, 32, %s2, [#allocation4]
    $region17: #{tpu_custom_call.1} parent=1 // pred_fallthru
      _
    // Predicated region
    $region18: #{tpu_custom_call.1} parent=1 // pred_check
      _
    $region19: #{tpu_custom_call.1} parent=1 // pred_check_branch
      %55 = sbr.rel (0) target = $region21
    $region20: #{tpu_custom_call.1} parent=1 // pred_region
      %56 = dma.done [#allocation4], 32
    $region21: #{tpu_custom_call.1} parent=1 // pred_fallthru
      _
    %57 = vsyncpa [#allocation3], 1
    %58 = vsyncpa [#allocation4], 1

</llo_original>
